<compile_context>
chip_gen: v7x
topology: tpu7x:2x2x1
jax: 0.10.0
libtpu: 0.0.40
codegen_flags: <defaults>
</compile_context>

<pallas_src>
import functools

import jax
import jax.numpy as jnp
from jax.experimental import pallas as pl
from jax.experimental.pallas import tpu as pltpu


def _ower_kernel(sents_ref, cew_t_ref, bias_ref, logits_ref, atts_ref, *,
                 activation, valid_s):
    """One batch tile of the Ower forward pass.

    sents_ref  : (TB, S, E)  bf16 -- streamed sentence embeddings
    cew_t_ref  : (E, 2C)     bf16 -- [class_embs; multi_weight]^T, VMEM resident
    bias_ref   : (1, C)      f32  -- multi_bias, VMEM resident
    logits_ref : (TB, C)     f32
    atts_ref   : (TB, C, S)  f32  -- module contract layout (no wrapper swap)
    valid_s    : None, or the number of real (unpadded) sentences when S was
                 padded up to a multiple of 8.
    """
    TB, S, E = sents_ref.shape
    C = cew_t_ref.shape[1] // 2

    sents = sents_ref[...]                                   # (TB, S, E) bf16

    # Single fused MXU matmul: scores (class_embs) and proj (multi_weight)
    # come out as the two lane-halves of `combined`.
    combined = jax.lax.dot_general(
        sents.reshape(TB * S, E), cew_t_ref[...],
        dimension_numbers=(((1,), (0,)), ((), ())),
        preferred_element_type=jnp.float32).reshape(TB, S, 2 * C)

    scores = combined[:, :, :C]          # <sents[b,s], class_embs[c]>
    proj = combined[:, :, C:]            # <sents[b,s], multi_weight[c]>

    if activation == 'softmax':          # softmax over the sentence axis S
        if valid_s is not None:          # mask zero-padded sentences out of the denom
            sidx = jax.lax.broadcasted_iota(jnp.int32, (1, S, 1), 1)
            scores = jnp.where(sidx < valid_s, scores, -1e30)
        m = jnp.max(scores, axis=1, keepdims=True)
        e = jnp.exp(scores - m)
        denom = jnp.sum(e, axis=1, keepdims=True)
        atts = e * pl.reciprocal(denom, approx=True)         # EUP vrcp (free slot)
    elif activation == 'sigmoid':
        # exp on EUP + approx reciprocal instead of a VPU divide sequence.
        atts = pl.reciprocal(1.0 + jnp.exp(-scores), approx=True)
    elif activation == 'relu':
        atts = jnp.maximum(scores, 0.0)
    else:                                # 'none'
        atts = scores

    # logits[b, c] = sum_s atts[b, s, c] * proj[b, s, c] + bias[c]
    # (== einsum('bce,ce->bc', atts @ sents, W) with the mixes tensor elided).
    logits = jnp.sum(atts * proj, axis=1) + bias_ref[...]    # (TB, C)
    logits_ref[...] = logits.astype(logits_ref.dtype)

    # Emit atts in the module's (B, C, S) layout: in-VMEM transpose of the
    # small per-tile result (XLU), instead of an extra HBM pass in the wrapper.
    atts_ref[...] = jnp.swapaxes(atts, 1, 2).astype(atts_ref.dtype)


def _vmem_capacity_bytes():
    try:
        return int(pltpu.get_tpu_info().vmem_capacity_bytes)
    except Exception:
        return 64 * 1024 * 1024   # conservative fallback (v7x per-core VMEM)


def _pick_batch_tile(B, S, E, C, budget_bytes):
    """Batch tile that (a) keeps the pipeline inside `budget_bytes`, (b) keeps
    the (TB, C) logits block legal (TB == full batch dim or TB % 8 == 0), and
    (c) aims for >= 2-4 grid steps so the 'parallel' axis feeds both v7x cores
    and the sents DMA overlaps compute.  The wrapper pads B up to a multiple of
    the returned tile, so no "TB = B busts the budget" fallback exists anymore.
    """
    if B <= 8:
        return B                           # single tile == full batch dim
    per_row = (4 * S * E                   # streamed bf16 sents, double-buffered
               + 2 * S * E                 # reshape / matmul staging slack
               + 8 * C * S                 # f32 atts out block, double-buffered
               + 32 * C * S                # combined / scores / proj / atts temps
               + 8 * C)                    # logits out block
    resident = 8 * E * C + 8 * C           # stacked bf16 weights (x2 bufs) + bias
    cap = max(8, (budget_bytes - resident) // max(per_row, 1))
    cap_tb = max(8, (cap // 8) * 8)
    target_tb = max(8, (B // 4 // 8) * 8)  # ~4 grid steps when B is large enough
    tb = max(8, min(cap_tb, target_tb))
    return min(tb, ((B + 7) // 8) * 8)


def ower_forward(sents_batch, class_embs, multi_weight, multi_bias,
                 activation='softmax'):
    """sents_batch: (B, S, E) f32 -> (logits (B, C), atts (B, C, S))."""
    if activation not in ('softmax', 'sigmoid', 'relu', 'none'):
        raise ValueError(f'Invalid activation function {activation}')

    B, S, E = sents_batch.shape
    C = class_embs.shape[0]

    # bf16 MXU inputs; also halves the streamed HBM bytes of sents.
    sents_bf = sents_batch.astype(jnp.bfloat16)

    # Pad S up to a multiple of 8 so in-kernel reshapes stay layout-preserving.
    S_pad = -(-S // 8) * 8
    if S_pad != S:
        sents_bf = jnp.pad(sents_bf, ((0, 0), (0, S_pad - S), (0, 0)))

    # Fused, pre-transposed weight: one (E, 2C) MXU operand, DMA'd once.
    cew_t = jnp.concatenate([class_embs, multi_weight], axis=0).T.astype(jnp.bfloat16)
    bias = multi_bias.reshape(1, C).astype(jnp.float32)

    phys_vmem = _vmem_capacity_bytes()
    budget = min(24 << 20, phys_vmem // 3)          # ~24 MiB v5e/v6e, ~21 MiB v7x
    TB = _pick_batch_tile(B, S_pad, E, C, budget)

    B_pad = -(-B // TB) * TB
    if B_pad != B:
        sents_bf = jnp.pad(sents_bf, ((0, B_pad - B), (0, 0), (0, 0)))

    kernel = functools.partial(_ower_kernel, activation=activation,
                               valid_s=(S if S_pad != S else None))

    logits, atts = pl.pallas_call(
        kernel,
        out_shape=(jax.ShapeDtypeStruct((B_pad, C), jnp.float32),
                   # TODO(synk): emit atts in bf16 if downstream allows -- it is
                   # the largest output and halving its writeback bytes moves
                   # the HBM-bound roofline; kept f32 for contract fidelity.
                   jax.ShapeDtypeStruct((B_pad, C, S_pad), jnp.float32)),
        grid_spec=pltpu.PrefetchScalarGridSpec(
            num_scalar_prefetch=0,
            grid=(B_pad // TB,),
            in_specs=[
                # Streamed operand.  (If the DMA is still exposed at production
                # sizes, pipeline_mode=pl.Buffered(3) here is the next knob.)
                pl.BlockSpec((TB, S_pad, E), lambda i: (i, 0, 0)),
                pl.BlockSpec((E, 2 * C), lambda i: (0, 0)),     # resident
                pl.BlockSpec((1, C), lambda i: (0, 0)),         # resident
            ],
            out_specs=(
                pl.BlockSpec((TB, C), lambda i: (i, 0)),
                pl.BlockSpec((TB, C, S_pad), lambda i: (i, 0, 0)),
            ),
        ),
        compiler_params=pltpu.CompilerParams(
            dimension_semantics=("parallel",),                  # megacore batch
            vmem_limit_bytes=int(min(phys_vmem // 2, 64 << 20))),
    )(sents_bf, cew_t, bias)

    if B_pad != B:
        logits = logits[:B]
        atts = atts[:B]
    if S_pad != S:
        atts = atts[:, :, :S]
    return logits, atts


def embed_tok_lists(tok_lists_batch, emb_table):
    """EmbeddingBag(mode='mean') over fixed-length bags: (B, S, L) -> (B, S, E).

    With a 2-D token matrix and no padding_idx, PyTorch's EmbeddingBag('mean')
    averages over all L tokens of every bag, so the unmasked mean is exact.
    """
    # TODO(synk): fuse this gather+mean into a Pallas kernel (scalar-prefetched
    # token ids + manual DMA gather from the HBM-resident emb_table) so the
    # (B, S, L, E) intermediate never hits HBM at production vocab sizes.
    gathered = jnp.take(emb_table, tok_lists_batch, axis=0)  # (B, S, L, E)
    return jnp.mean(gathered, axis=2)                        # (B, S, E)


def ower_apply(tok_lists_batch, emb_table, class_embs, multi_weight,
               multi_bias, activation='softmax'):
    sents_batch = embed_tok_lists(tok_lists_batch, emb_table)
    return ower_forward(sents_batch, class_embs, multi_weight, multi_bias,
                        activation)


def _reference(sents, class_embs, multi_weight, multi_bias, activation):
    """Pure-JAX transcription of the PyTorch forward (with the same bf16
    rounding of the matmul operands that the kernel applies)."""
    s = sents.astype(jnp.bfloat16).astype(jnp.float32)
    ce = class_embs.astype(jnp.bfloat16).astype(jnp.float32)
    w = multi_weight.astype(jnp.bfloat16).astype(jnp.float32)
    scores = jnp.einsum('ce,bse->bcs', ce, s)
    if activation == 'softmax':
        atts = jax.nn.softmax(scores, axis=-1)
    elif activation == 'sigmoid':
        atts = jax.nn.sigmoid(scores)
    elif activation == 'relu':
        atts = jnp.maximum(scores, 0.0)
    else:
        atts = scores
    mixes = jnp.einsum('bcs,bse->bce', atts, s)
    logits = jnp.einsum('bce,ce->bc', mixes, w) + multi_bias
    return logits, atts


if __name__ == "__main__":
    # Ower.from_random(vocab_size, emb_size, class_count, mode='mean', ...)
    vocab_size, emb_size, class_count = 32, 32, 4

    key = jax.random.PRNGKey(0)
    k1, k2, k3, k4 = jax.random.split(key, 4)
    emb_table = jax.random.normal(k1, (vocab_size, emb_size), jnp.float32)
    class_embs = jax.random.normal(k2, (class_count, emb_size), jnp.float32)
    multi_weight = jax.random.normal(k3, (class_count, emb_size), jnp.float32)
    multi_bias = jax.random.normal(k4, (class_count,), jnp.float32)

    # (batch, sent_count, sent_len): an aligned config and one that exercises
    # the S-padding / batch-padding / multi-step-grid paths.
    configs = [(2, 8, 8), (10, 6, 5)]

    for (batch_size, sent_count, sent_len) in configs:
        kt = jax.random.fold_in(key, 100 * sent_count + sent_len)
        tok_lists = jax.random.randint(
            kt, (batch_size, sent_count, sent_len), 0, vocab_size, jnp.int32)
        sents = embed_tok_lists(tok_lists, emb_table)

        for activation in ('softmax', 'sigmoid', 'relu', 'none'):
            logits, atts = ower_apply(tok_lists, emb_table, class_embs,
                                      multi_weight, multi_bias, activation)
            jax.block_until_ready((logits, atts))

            logits_ref, atts_ref = _reference(sents, class_embs, multi_weight,
                                              multi_bias, activation)

            assert logits.shape == (batch_size, class_count)
            assert atts.shape == (batch_size, class_count, sent_count)
            # Softmax/sigmoid use the EUP approximate reciprocal -> looser tol.
            tol = 2e-2 if activation == 'softmax' else 5e-3
            assert jnp.allclose(logits, logits_ref, atol=tol, rtol=tol), activation
            assert jnp.allclose(atts, atts_ref, atol=tol, rtol=tol), activation

    print("KERNEL_OK")
</pallas_src>

<mosaic_0001>
module attributes {stable_mosaic.version = 11 : i64} {
  func.func @_ower_kernel(%arg0: i32, %arg1: memref<2x8x32xbf16, #tpu.memory_space<vmem>>, %arg2: memref<32x8xbf16, #tpu.memory_space<vmem>>, %arg3: memref<1x4xf32, #tpu.memory_space<vmem>>, %arg4: memref<2x4xf32, #tpu.memory_space<vmem>>, %arg5: memref<2x4x8xf32, #tpu.memory_space<vmem>>) attributes {dimension_semantics = [#tpu.dimension_semantics<parallel>], iteration_bounds = array<i64: 1>, scalar_prefetch = 0 : i64, scratch_operands = 0 : i64, tpu.core_type = #tpu.core_type<tc>, window_params = [{transform_indices = @transform_0, window_bounds = array<i64: 2, 8, 32>}, {pipeline_mode = #tpu.pipeline_mode<synchronous>, transform_indices = @transform_1, window_bounds = array<i64: 32, 8>}, {pipeline_mode = #tpu.pipeline_mode<synchronous>, transform_indices = @transform_2, window_bounds = array<i64: 1, 4>}, {transform_indices = @transform_3, window_bounds = array<i64: 2, 4>}, {transform_indices = @transform_4, window_bounds = array<i64: 2, 4, 8>}]} {
    %c0 = arith.constant 0 : index
    %c0_0 = arith.constant 0 : index
    %c0_1 = arith.constant 0 : index
    %0 = vector.load %arg1[%c0, %c0_0, %c0_1] : memref<2x8x32xbf16, #tpu.memory_space<vmem>>, vector<2x8x32xbf16>
    %1 = vector.shape_cast %0 : vector<2x8x32xbf16> to vector<16x32xbf16>
    %c0_2 = arith.constant 0 : index
    %c0_3 = arith.constant 0 : index
    %2 = vector.load %arg2[%c0_2, %c0_3] : memref<32x8xbf16, #tpu.memory_space<vmem>>, vector<32x8xbf16>
    %cst = arith.constant dense<0.000000e+00> : vector<16x8xf32>
    %3 = tpu.matmul %1, %2, %cst {dimension_numbers = #tpu.dot_dimension_numbers<[1], [0], [0], [1], [0, 0, 1, 1], [], []>} : vector<16x32xbf16>, vector<32x8xbf16>, vector<16x8xf32> -> vector<16x8xf32>
    %4 = vector.shape_cast %3 : vector<16x8xf32> to vector<2x8x8xf32>
    %5 = vector.extract_strided_slice %4 {offsets = [0, 0, 0], sizes = [2, 8, 4], strides = [1, 1, 1]} : vector<2x8x8xf32> to vector<2x8x4xf32>
    %6 = vector.extract_strided_slice %4 {offsets = [0, 0, 4], sizes = [2, 8, 4], strides = [1, 1, 1]} : vector<2x8x8xf32> to vector<2x8x4xf32>
    %cst_4 = arith.constant dense<0xFF800000> : vector<2x4xf32>
    %7 = vector.multi_reduction <maximumf>, %5, %cst_4 [1] : vector<2x8x4xf32> to vector<2x4xf32>
    %8 = vector.shape_cast %7 : vector<2x4xf32> to vector<2x1x4xf32>
    %9 = vector.broadcast %8 : vector<2x1x4xf32> to vector<2x8x4xf32>
    %10 = arith.subf %5, %9 : vector<2x8x4xf32>
    %11 = math.exp %10 : vector<2x8x4xf32>
    %cst_5 = arith.constant dense<0.000000e+00> : vector<2x4xf32>
    %12 = vector.multi_reduction <add>, %11, %cst_5 [1] : vector<2x8x4xf32> to vector<2x4xf32>
    %13 = vector.shape_cast %12 : vector<2x4xf32> to vector<2x1x4xf32>
    %14 = tpu.reciprocal %13 {approx = true} : vector<2x1x4xf32> -> vector<2x1x4xf32>
    %15 = vector.broadcast %14 : vector<2x1x4xf32> to vector<2x8x4xf32>
    %16 = arith.mulf %11, %15 : vector<2x8x4xf32>
    %17 = arith.mulf %16, %6 : vector<2x8x4xf32>
    %cst_6 = arith.constant dense<0.000000e+00> : vector<2x4xf32>
    %18 = vector.multi_reduction <add>, %17, %cst_6 [1] : vector<2x8x4xf32> to vector<2x4xf32>
    %c0_7 = arith.constant 0 : index
    %c0_8 = arith.constant 0 : index
    %19 = vector.load %arg3[%c0_7, %c0_8] : memref<1x4xf32, #tpu.memory_space<vmem>>, vector<1x4xf32>
    %20 = vector.broadcast %19 : vector<1x4xf32> to vector<2x4xf32>
    %21 = arith.addf %18, %20 : vector<2x4xf32>
    %c0_9 = arith.constant 0 : index
    %c0_10 = arith.constant 0 : index
    %22 = vector.load %arg4[%c0_9, %c0_10] : memref<2x4xf32, #tpu.memory_space<vmem>>, vector<2x4xf32>
    tpu.vector_store %arg4[%c0_9, %c0_10], %21 {strides = array<i32>} : memref<2x4xf32, #tpu.memory_space<vmem>>, vector<2x4xf32>,
    %23 = tpu.transpose %16, [0, 2, 1] : vector<2x8x4xf32> -> vector<2x4x8xf32>
    %c0_11 = arith.constant 0 : index
    %c0_12 = arith.constant 0 : index
    %c0_13 = arith.constant 0 : index
    %24 = vector.load %arg5[%c0_11, %c0_12, %c0_13] : memref<2x4x8xf32, #tpu.memory_space<vmem>>, vector<2x4x8xf32>
    tpu.vector_store %arg5[%c0_11, %c0_12, %c0_13], %23 {strides = array<i32>} : memref<2x4x8xf32, #tpu.memory_space<vmem>>, vector<2x4x8xf32>,
    return
  }
  func.func @transform_0(%arg0: i32) -> (i32, i32, i32) {
    %c0_i32 = arith.constant 0 : i32
    %c0_i32_0 = arith.constant 0 : i32
    %c0_i32_1 = arith.constant 0 : i32
    return %arg0, %c0_i32, %c0_i32_0 : i32, i32, i32
  }
  func.func @transform_1(%arg0: i32) -> (i32, i32) {
    %c0_i32 = arith.constant 0 : i32
    %c0_i32_0 = arith.constant 0 : i32
    %c0_i32_1 = arith.constant 0 : i32
    return %c0_i32, %c0_i32_0 : i32, i32
  }
  func.func @transform_2(%arg0: i32) -> (i32, i32) {
    %c0_i32 = arith.constant 0 : i32
    %c0_i32_0 = arith.constant 0 : i32
    %c0_i32_1 = arith.constant 0 : i32
    return %c0_i32, %c0_i32_0 : i32, i32
  }
  func.func @transform_3(%arg0: i32) -> (i32, i32) {
    %c0_i32 = arith.constant 0 : i32
    %c0_i32_0 = arith.constant 0 : i32
    return %arg0, %c0_i32 : i32, i32
  }
  func.func @transform_4(%arg0: i32) -> (i32, i32, i32) {
    %c0_i32 = arith.constant 0 : i32
    %c0_i32_0 = arith.constant 0 : i32
    %c0_i32_1 = arith.constant 0 : i32
    return %arg0, %c0_i32, %c0_i32_0 : i32, i32, i32
  }
}

</mosaic_0001>

<llo_original>
// kernel: tpu_custom_call.1
$region0: #{tpu_custom_call.1}
  #allocation0 [shape = 'u32[]', space=smem, size = 0x4, offset = 0x4, fixed_abs, tag = 'smem constant byte address 0x4 - core index']
  #allocation1 [shape = 'u32[144,128]{1,0:T(1,128)}', space=vmem, size = 0x12000, scoped, tag = 'internal scratch']
  %s0 = inlined_call_operand.vmem [shape: bf16[2,8,32], index: 0, kind: input, shape index: {}]
  %s1 = inlined_call_operand.vmem [shape: bf16[32,8], index: 1, kind: input, shape index: {}]
  %s2 = inlined_call_operand.vmem [shape: f32[1,4], index: 2, kind: input, shape index: {}]
  %s3 = inlined_call_operand.hbm [shape: f32[2,4], index: 3, kind: output, shape index: {0}]
  %s4 = inlined_call_operand.hbm [shape: f32[2,4,8], index: 4, kind: output, shape index: {1}]
  %5 = xla_tuple %s3, %s4
  %s6 = sld [smem:[#allocation0]]
  $region30: #{tpu_custom_call.1} parent=0
    _
  %s8 = ssub.s32 1, %s6
  %s9 = scalar_select 0, %s8, %s6
  $region1: #{tpu_custom_call.1} parent=0
    #allocation2 [shape = 'u8[1024]{0}', space=vmem, size = 0x400, scoped, tag = 'output window, operand 0, single buffered']
    #allocation3 [shape = 's32[1]{0}', space=sflag, size = 0x4, scoped, tag = 'scoped memory for tpu_custom_call.1']
    #allocation4 [shape = 'u8[4096]{0}', space=vmem, size = 0x1000, scoped, tag = 'output window, operand 1, single buffered']
    #allocation5 [shape = 's32[1]{0}', space=sflag, size = 0x4, scoped, tag = 'scoped memory for tpu_custom_call.1']
    %10 = vsyncpa [#allocation3], 0
    %11 = vsyncpa [#allocation5], 0
    // Predicated region
    $region2: #{tpu_custom_call.1} parent=1 // pred_check
      _
    $region3: #{tpu_custom_call.1} parent=1 // pred_check_branch
      %13 = sbr.rel (0) target = $region5
    $region4: #{tpu_custom_call.1} parent=1 // pred_region
      _
    $region5: #{tpu_custom_call.1} parent=1 // pred_fallthru
      _
    // Predicated region
    $region6: #{tpu_custom_call.1} parent=1 // pred_check
      _
    $region7: #{tpu_custom_call.1} parent=1 // pred_check_branch
      %15 = sbr.rel (0) target = $region9
    $region8: #{tpu_custom_call.1} parent=1 // pred_region
      _
    $region9: #{tpu_custom_call.1} parent=1 // pred_fallthru
      _
    // Predicated region
    $region10: #{tpu_custom_call.1} parent=1 // pred_check
      _
    $region11: #{tpu_custom_call.1} parent=1 // pred_check_branch
      %17 = sbr.rel (0) target = $region13
    $region12: #{tpu_custom_call.1} parent=1 // pred_region
      _
    $region13: #{tpu_custom_call.1} parent=1 // pred_fallthru
      _
    %v19 = vld [vmem:[%s0] sm:$0xf]
    %v20 = vld [vmem:[%s0 + $0x4] sm:$0xf]
    %v21 = vld [vmem:[%s1] sm:$0xf]
    %v22 = vld [vmem:[%s1 + $0x4] sm:$0xf]
    %v23 = vld [vmem:[%s1 + $0x8] sm:$0xf]
    %v24 = vld [vmem:[%s1 + $0xc] sm:$0xf]
    %v27 = vunpack.c.l.b16 %v19
    %v28 = vunpack.c.l.b16 %v20
    %v29 = vpack.c.b16 %v28, %v27
    %v34 = vunpack.c.l.b16 %v21
    %v35 = vunpack.c.l.b16 %v22
    %v36 = vunpack.c.l.b16 %v23
    %v37 = vunpack.c.l.b16 %v24
    %v38 = vpack.c.b16 %v35, %v34
    %v39 = vpack.c.b16 %v37, %v36
    %vm42 = vcmask 261120
    %v44 = vsel %vm42, %v29, 0
    %46 = vmatprep.subr.bf16.mxu0 0
    %47 = vmatpush1.bf16.msra.mxu0 %v38
    %48 = vmatprep.subr.bf16.mxu0 0
    %49 = vmatpush1.bf16.msra.mxu0 %v39
    %50 = vmatprep.subr.bf16.mxu0 0
    %51 = vmatpush1.bf16.msra.mxu0 0
    %52 = vmatprep.subr.bf16.mxu0 0
    %53 = vmatpush1.bf16.msra.mxu0 0
    %54 = vmatprep.subr.bf16.mxu0 0
    %55 = vmatpush1.bf16.msra.mxu0 0
    %56 = vmatprep.subr.bf16.mxu0 0
    %57 = vmatpush1.bf16.msra.mxu0 0
    %58 = vmatprep.subr.bf16.mxu0 0
    %59 = vmatpush1.bf16.msra.mxu0 0
    %60 = vmatprep.subr.bf16.mxu0 0
    %61 = vmatpush1.bf16.msra.mxu0 0
    %62 = vmatprep.subr.bf16.mxu0 0
    %63 = vmatpush1.bf16.msra.mxu0 0
    %64 = vmatprep.subr.bf16.mxu0 0
    %65 = vmatpush1.bf16.msra.mxu0 0
    %66 = vmatprep.subr.bf16.mxu0 0
    %67 = vmatpush1.bf16.msra.mxu0 0
    %68 = vmatprep.subr.bf16.mxu0 0
    %69 = vmatpush1.bf16.msra.mxu0 0
    %70 = vmatprep.subr.bf16.mxu0 0
    %71 = vmatpush1.bf16.msra.mxu0 0
    %72 = vmatprep.subr.bf16.mxu0 0
    %73 = vmatpush1.bf16.msra.mxu0 0
    %74 = vmatprep.subr.bf16.mxu0 0
    %75 = vmatpush1.bf16.msra.mxu0 0
    %76 = vmatprep.subr.bf16.mxu0 0
    %77 = vmatpush1.bf16.msra.mxu0 0
    %78 = vmatprep.mubr.bf16.mxu0 0
    %79 = vmatmul.mubr.bf16.gmra.mrb[0].mxu0 %v44
    %v80 = vpop.f32.mrb[0].mxu0
    %v81 = vadd.f32 0.0, %v80
    %v82 = vpop.f32.mrb[0].mxu0
    %v83 = vpop.f32.mrb[0].mxu0
    %v84 = vadd.f32 0.0, %v83
    %v85 = vpop.f32.mrb[0].mxu0
    %86 = vdwg.mxu0
    %vm87 = vcmask 31744
    %v88 = vsel %vm87, %v81, -inf
    %v89 = vrot.slane %v88, 4
    %v90 = vmax.f32 %v88, %v89
    %v91 = vrot.slane %v90, 2
    %v92 = vmax.f32 %v90, %v91
    %v93 = vrot.slane %v92, 1
    %v94 = vmax.f32 %v92, %v93
    %v95 = vsel %vm87, %v84, -inf
    %v96 = vrot.slane %v95, 4
    %v97 = vmax.f32 %v95, %v96
    %v98 = vrot.slane %v97, 2
    %v99 = vmax.f32 %v97, %v98
    %v100 = vrot.slane %v99, 1
    %v101 = vmax.f32 %v99, %v100
    %v102 = vsub.f32 %v81, %v94
    %v103 = vsub.f32 %v84, %v101
    %v104 = vmul.f32 %v102, 1.442695
    %v105 = vpow.pop %v104
    %v106 = vmul.f32 %v103, 1.442695
    %v107 = vpow.pop %v106
    %v108 = vsel %vm87, %v105, 0.0
    %v109 = vrot.slane %v108, 4
    %v110 = vadd.f32 %v108, %v109
    %v111 = vrot.slane %v110, 2
    %v112 = vadd.f32 %v110, %v111
    %v113 = vrot.slane %v112, 1
    %v114 = vadd.f32 %v112, %v113
    %v115 = vsel %vm87, %v107, 0.0
    %v116 = vrot.slane %v115, 4
    %v117 = vadd.f32 %v115, %v116
    %v118 = vrot.slane %v117, 2
    %v119 = vadd.f32 %v117, %v118
    %v120 = vrot.slane %v119, 1
    %v121 = vadd.f32 %v119, %v120
    %v122 = vrcp.pop %v114
    %v123 = vrcp.pop %v121
    %v124 = vmul.f32 %v105, %v122
    %v125 = vmul.f32 %v107, %v123
    %128 = vrot.lane.b32.xlu0 %v81, 124
    %v129 = vpop.permute.xlu0 %128
    %130 = vrot.lane.b32.xlu0 %v84, 124
    %v131 = vpop.permute.xlu0 %130
    %v134 = vmul.f32 %v124, %v129
    %v135 = vmul.f32 %v125, %v131
    %v136 = vsel %vm87, %v134, 0.0
    %v137 = vrot.slane %v136, 4
    %v138 = vadd.f32 %v136, %v137
    %v139 = vrot.slane %v138, 2
    %v140 = vadd.f32 %v138, %v139
    %v141 = vrot.slane %v140, 1
    %v142 = vadd.f32 %v140, %v141
    %v143 = vsel %vm87, %v135, 0.0
    %v144 = vrot.slane %v143, 4
    %v145 = vadd.f32 %v143, %v144
    %v146 = vrot.slane %v145, 2
    %v147 = vadd.f32 %v145, %v146
    %v148 = vrot.slane %v147, 1
    %v149 = vadd.f32 %v147, %v148
    %v150 = vld [vmem:[%s2] sm:$0x1]
    %v152 = vlaneseq
    %v153 = vshrl.u32 %v152, 7
    %v154 = vsub.s32 0, %v153
    %v155 = vrot.slane %v150, %v154
    %v157 = vadd.f32 %v142, %v155
    %v158 = vadd.f32 %v149, %v155
    %v161 = vrot.slane %v158, 7
    %vm162 = vcmask 1041409
    %v163 = vsel %vm162, %v161, %v157
    %vm165 = vcmask 25600
    %166 = vst.msk [vmem:[#allocation2] sm:$0x3] %vm165, %v163
    %167 = vxpose.xlu0.b32.start [1/16] %v124, 128
    %168 = vxpose.xlu0.b32.cont [2/16] 0.0, 128
    %169 = vxpose.xlu0.b32.cont [3/16] 0.0, 128
    %170 = vxpose.xlu0.b32.cont [4/16] 0.0, 128
    %171 = vxpose.xlu0.b32.cont [5/16] 0.0, 128
    %172 = vxpose.xlu0.b32.cont [6/16] 0.0, 128
    %173 = vxpose.xlu0.b32.cont [7/16] 0.0, 128
    %174 = vxpose.xlu0.b32.cont [8/16] 0.0, 128
    %175 = vxpose.xlu0.b32.cont [9/16] 0.0, 128
    %176 = vxpose.xlu0.b32.cont [10/16] 0.0, 128
    %177 = vxpose.xlu0.b32.cont [11/16] 0.0, 128
    %178 = vxpose.xlu0.b32.cont [12/16] 0.0, 128
    %179 = vxpose.xlu0.b32.cont [13/16] 0.0, 128
    %180 = vxpose.xlu0.b32.cont [14/16] 0.0, 128
    %181 = vxpose.xlu0.b32.cont [15/16] 0.0, 128
    %182 = vxpose.xlu0.b32.end [16/16] 0.0, 128
    %v183 = vpop.trf.xlu0
    %v184 = vpop.trf.xlu0
    %v185 = vpop.trf.xlu0
    %v186 = vpop.trf.xlu0
    %v187 = vpop.trf.xlu0
    %v188 = vpop.trf.xlu0
    %v189 = vpop.trf.xlu0
    %v190 = vpop.trf.xlu0
    %v191 = vpop.trf.xlu0
    %v192 = vpop.trf.xlu0
    %v193 = vpop.trf.xlu0
    %v194 = vpop.trf.xlu0
    %v195 = vpop.trf.xlu0
    %v196 = vpop.trf.xlu0
    %v197 = vpop.trf.xlu0
    %v198 = vpop.trf.xlu0
    %199 = vxpose.xlu0.b32.start [1/16] %v125, 128
    %200 = vxpose.xlu0.b32.cont [2/16] 0.0, 128
    %201 = vxpose.xlu0.b32.cont [3/16] 0.0, 128
    %202 = vxpose.xlu0.b32.cont [4/16] 0.0, 128
    %203 = vxpose.xlu0.b32.cont [5/16] 0.0, 128
    %204 = vxpose.xlu0.b32.cont [6/16] 0.0, 128
    %205 = vxpose.xlu0.b32.cont [7/16] 0.0, 128
    %206 = vxpose.xlu0.b32.cont [8/16] 0.0, 128
    %207 = vxpose.xlu0.b32.cont [9/16] 0.0, 128
    %208 = vxpose.xlu0.b32.cont [10/16] 0.0, 128
    %209 = vxpose.xlu0.b32.cont [11/16] 0.0, 128
    %210 = vxpose.xlu0.b32.cont [12/16] 0.0, 128
    %211 = vxpose.xlu0.b32.cont [13/16] 0.0, 128
    %212 = vxpose.xlu0.b32.cont [14/16] 0.0, 128
    %213 = vxpose.xlu0.b32.cont [15/16] 0.0, 128
    %214 = vxpose.xlu0.b32.end [16/16] 0.0, 128
    %v215 = vpop.trf.xlu0
    %v216 = vpop.trf.xlu0
    %v217 = vpop.trf.xlu0
    %v218 = vpop.trf.xlu0
    %v219 = vpop.trf.xlu0
    %v220 = vpop.trf.xlu0
    %v221 = vpop.trf.xlu0
    %v222 = vpop.trf.xlu0
    %v223 = vpop.trf.xlu0
    %v224 = vpop.trf.xlu0
    %v225 = vpop.trf.xlu0
    %v226 = vpop.trf.xlu0
    %v227 = vpop.trf.xlu0
    %v228 = vpop.trf.xlu0
    %v229 = vpop.trf.xlu0
    %v230 = vpop.trf.xlu0
    %vm231 = vcmask 60416
    %232 = vst.msk [vmem:[#allocation4] sm:$0xf] %vm231, %v183
    %233 = vst.msk [vmem:[#allocation4 + $0x4] sm:$0xf] %vm231, %v215
    // Predicated region
    $region14: #{tpu_custom_call.1} parent=1 // pred_check
      _
    $region15: #{tpu_custom_call.1} parent=1 // pred_check_branch
      %235 = sbr.rel (0) target = $region17
    $region16: #{tpu_custom_call.1} parent=1 // pred_region
      %s237 = ssub.s32 32, 32
      %238 = vsyncadd [#allocation3], %s237
      %s240 = sshll.u32 [#allocation2], 4
      %s241 = int_to_ptr.vmem [resolvable:$true] %s240
      %243 = dma.vmem_to_hbm [thread:$0]  %s241, 32, %s3, [#allocation3]
    $region17: #{tpu_custom_call.1} parent=1 // pred_fallthru
      _
    // Predicated region
    $region18: #{tpu_custom_call.1} parent=1 // pred_check
      _
    $region19: #{tpu_custom_call.1} parent=1 // pred_check_branch
      %245 = sbr.rel (0) target = $region21
    $region20: #{tpu_custom_call.1} parent=1 // pred_region
      %s247 = ssub.s32 128, 128
      %248 = vsyncadd [#allocation5], %s247
      %s249 = sshll.u32 [#allocation4], 4
      %s250 = int_to_ptr.vmem [resolvable:$true] %s249
      %255 = dma.vmem_to_hbm [thread:$0]  %s250, 128, %s4, [#allocation5], 64, 64, 4
    $region21: #{tpu_custom_call.1} parent=1 // pred_fallthru
      _
    // Predicated region
    $region22: #{tpu_custom_call.1} parent=1 // pred_check
      _
    $region23: #{tpu_custom_call.1} parent=1 // pred_check_branch
      %257 = sbr.rel (0) target = $region25
    $region24: #{tpu_custom_call.1} parent=1 // pred_region
      %258 = dma.done [#allocation3], 32
    $region25: #{tpu_custom_call.1} parent=1 // pred_fallthru
      _
    // Predicated region
    $region26: #{tpu_custom_call.1} parent=1 // pred_check
      _
    $region27: #{tpu_custom_call.1} parent=1 // pred_check_branch
      %260 = sbr.rel (0) target = $region29
    $region28: #{tpu_custom_call.1} parent=1 // pred_region
      %261 = dma.done [#allocation5], 128
    $region29: #{tpu_custom_call.1} parent=1 // pred_fallthru
      _
    %262 = vsyncpa [#allocation3], 1
    %263 = vsyncpa [#allocation5], 1

</llo_original>
